<compile_context>
chip_gen: v7x
topology: tpu7x:2x2x1
jax: 0.10.0
libtpu: 0.0.40
codegen_flags: <defaults>
</compile_context>

<pallas_src>
import functools

import jax
import jax.numpy as jnp
from jax.experimental import pallas as pl
from jax.experimental.pallas import tpu as pltpu

_LANE = 128


def _pick_tn(n, cap=8):
    # Rows of the batch blocked per grid step.  The (TN, C) gate block needs
    # TN == N or TN a multiple of 8 that divides N (TPU (8,128) block rule).
    if n <= cap:
        return n
    if n % 8 == 0:
        return 8
    return n


def _pick_hw_tile(hw, rows, itemsize, max_block_bytes):
    # Largest lane-dense (multiple of 128) spatial tile dividing HW whose
    # (rows, tile) block stays under the per-block byte budget.
    if hw % _LANE != 0:
        return hw  # small / irregular spatial extent: take the full axis
    cands = [t for t in range(_LANE, hw + 1, _LANE) if hw % t == 0]
    best = cands[0]
    for t in cands:
        if rows * t * itemsize <= max_block_bytes:
            best = t
    return best


def _squeeze_excite_gate(pooled, w1t, w2t):
    # pooled: (TN, C) f32; w1t: (C, C//2); w2t: (C//2, C).  Returns f32 gate.
    c = w1t.shape[0]
    w1 = w1t.astype(jnp.float32)
    w2 = w2t.astype(jnp.float32)
    if c >= 128:
        # MXU-friendly channel counts: TN-wide matmuls, transpose-free.
        z1 = jnp.dot(pooled, w1, preferred_element_type=jnp.float32)
        z2 = jnp.dot(z1, w2, preferred_element_type=jnp.float32)
    else:
        # Tiny channel counts (e.g. the unit test): do the 1x1 convs on the
        # VPU/XLU; MXU tiles would be almost entirely padding.
        z1 = jnp.sum(pooled[:, :, None] * w1[None, :, :], axis=1)
        z2 = jnp.sum(z1[:, :, None] * w2[None, :, :], axis=1)
    return jax.nn.sigmoid(z2)


def _fused_cse_kernel(inv_hw, x_ref, w1t_ref, w2t_ref, o_ref):
    # x_ref/o_ref: (TN, C, HW); w1t_ref: (C, C//2); w2t_ref: (C//2, C)
    x = x_ref[...]                                               # input dtype
    pooled = jnp.sum(x, axis=-1, dtype=jnp.float32) * inv_hw     # (TN, C) f32
    gate = _squeeze_excite_gate(pooled, w1t_ref[...], w2t_ref[...])
    o_ref[...] = x * gate.astype(o_ref.dtype)[:, :, None]


def _pool_gate_kernel(inv_hw, x_ref, w1t_ref, w2t_ref, gate_ref, acc_ref):
    # Pass 1: spatial-sum accumulation, then squeeze/excite/sigmoid at the end.
    # x_ref: (TN, C, T); gate_ref: (TN, C) f32; acc_ref: (TN, C) f32 scratch.
    h = pl.program_id(1)

    @pl.when(h == 0)
    def _():
        acc_ref[...] = jnp.zeros_like(acc_ref)

    # Accumulate in f32 without materializing an f32 copy of the slab.
    acc_ref[...] += jnp.sum(x_ref[...], axis=-1, dtype=jnp.float32)

    @pl.when(h == pl.num_programs(1) - 1)
    def _():
        pooled = acc_ref[...] * inv_hw                 # divide by the TRUE H*W
        gate_ref[...] = _squeeze_excite_gate(pooled, w1t_ref[...], w2t_ref[...])


def _gate_mul_kernel(x_ref, gate_ref, o_ref):
    # Pass 2: broadcast-multiply by the per-(n, c) gate, in the input dtype.
    gate = gate_ref[...].astype(o_ref.dtype)[:, :, None]          # (TN, C, 1)
    o_ref[...] = x_ref[...] * gate


def cse_forward(U, w_squeeze, w_excite, *, max_block_bytes=4 << 20):
    """cSE forward. U: (N, C, H, W); w_squeeze: (C//2, C); w_excite: (C, C//2)."""
    N, C, H, W = U.shape
    Ch = C // 2
    HW = H * W
    x = U.reshape(N, C, HW)
    inv_hw = 1.0 / float(HW)

    # Pre-transpose weights once so the in-kernel 1x1 convs are TN-wide and
    # transpose-free: (TN,C)@(C,Ch) then (TN,Ch)@(Ch,C).
    w1t = jnp.transpose(w_squeeze)   # (C, C//2)
    w2t = jnp.transpose(w_excite)    # (C//2, C)

    itemsize = jnp.dtype(U.dtype).itemsize
    TN = _pick_tn(N)
    HW_T = _pick_hw_tile(HW, TN * C, itemsize, max_block_bytes)
    n_blocks = N // TN
    hw_blocks = HW // HW_T

    block_bytes = TN * C * HW_T * itemsize
    # Raise the scoped-VMEM cap above the conservative default; keep it well
    # under v7x's 64 MiB physical VMEM.  ~4 double-buffered blocks + weights.
    vmem_limit = int(min(48 << 20, max(16 << 20, 8 * block_bytes)))

    if hw_blocks == 1:
        # Fused path: the whole (TN, C, HW) slab fits the budget -> read U once.
        out = pl.pallas_call(
            functools.partial(_fused_cse_kernel, inv_hw),
            out_shape=jax.ShapeDtypeStruct((N, C, HW), U.dtype),
            grid_spec=pltpu.PrefetchScalarGridSpec(
                num_scalar_prefetch=0,
                grid=(n_blocks,),
                in_specs=[
                    pl.BlockSpec((TN, C, HW), lambda n: (n, 0, 0)),
                    pl.BlockSpec((C, Ch), lambda n: (0, 0)),
                    pl.BlockSpec((Ch, C), lambda n: (0, 0)),
                ],
                out_specs=pl.BlockSpec((TN, C, HW), lambda n: (n, 0, 0)),
            ),
            compiler_params=pltpu.CompilerParams(
                dimension_semantics=("parallel",),
                vmem_limit_bytes=vmem_limit),
        )(x, w1t, w2t)
        return out.reshape(N, C, H, W)

    # ---------------- Scalable two-pass path ----------------
    # Pass 1: spatial reduction -> pooled mean -> squeeze/excite/sigmoid gate.
    gate = pl.pallas_call(
        functools.partial(_pool_gate_kernel, inv_hw),
        out_shape=jax.ShapeDtypeStruct((N, C), jnp.float32),
        grid_spec=pltpu.PrefetchScalarGridSpec(
            num_scalar_prefetch=0,
            grid=(n_blocks, hw_blocks),
            in_specs=[
                pl.BlockSpec((TN, C, HW_T), lambda n, h: (n, 0, h)),
                pl.BlockSpec((C, Ch), lambda n, h: (0, 0)),
                pl.BlockSpec((Ch, C), lambda n, h: (0, 0)),
            ],
            out_specs=pl.BlockSpec((TN, C), lambda n, h: (n, 0)),
            scratch_shapes=[pltpu.VMEM((TN, C), jnp.float32)],
        ),
        compiler_params=pltpu.CompilerParams(
            dimension_semantics=("parallel", "arbitrary"),
            vmem_limit_bytes=vmem_limit),
    )(x, w1t, w2t)

    # Pass 2: lane-dense broadcast-multiply; both axes parallel so the spatial
    # axis still feeds both v7x TensorCores when N == 1.
    out = pl.pallas_call(
        _gate_mul_kernel,
        out_shape=jax.ShapeDtypeStruct((N, C, HW), U.dtype),
        grid_spec=pltpu.PrefetchScalarGridSpec(
            num_scalar_prefetch=0,
            grid=(n_blocks, hw_blocks),
            in_specs=[
                pl.BlockSpec((TN, C, HW_T), lambda n, h: (n, 0, h)),
                pl.BlockSpec((TN, C), lambda n, h: (n, 0)),
            ],
            out_specs=pl.BlockSpec((TN, C, HW_T), lambda n, h: (n, 0, h)),
        ),
        compiler_params=pltpu.CompilerParams(
            dimension_semantics=("parallel", "parallel"),
            vmem_limit_bytes=vmem_limit),
    )(x, gate)

    return out.reshape(N, C, H, W)


def cse_reference(U, w_squeeze, w_excite):
    # Pure-JAX reference mirroring the PyTorch module.
    z = jnp.mean(U, axis=(2, 3))                      # (N, C) adaptive avg pool
    z = jnp.einsum('oc,nc->no', w_squeeze, z)         # Conv_Squeeze 1x1 (no bias)
    z = jnp.einsum('oc,nc->no', w_excite, z)          # Conv_Excitation 1x1
    z = jax.nn.sigmoid(z)                             # norm
    return U * z[:, :, None, None]                    # expand_as + multiply


if __name__ == "__main__":
    N, C, H, W = 2, 4, 16, 16

    key = jax.random.PRNGKey(0)
    k_u, k_w1, k_w2 = jax.random.split(key, 3)

    U = jax.random.normal(k_u, (N, C, H, W), dtype=jnp.float32)
    # Conv2d(C, C//2, kernel_size=1, bias=False) weights squeezed from
    # (C//2, C, 1, 1) -> (C//2, C); likewise for excitation.
    w_squeeze = jax.random.normal(k_w1, (C // 2, C), dtype=jnp.float32) * 0.1
    w_excite = jax.random.normal(k_w2, (C, C // 2), dtype=jnp.float32) * 0.1

    ref = cse_reference(U, w_squeeze, w_excite)

    # Fused path (whole spatial slab fits the per-block budget).
    out_fused = jax.block_until_ready(cse_forward(U, w_squeeze, w_excite))
    assert out_fused.shape == U.shape
    assert jnp.allclose(out_fused, ref, atol=1e-5, rtol=1e-5), "fused mismatch"

    # Force the spatially tiled two-pass path (used for realistic C*HW sizes).
    out_tiled = jax.block_until_ready(
        cse_forward(U, w_squeeze, w_excite, max_block_bytes=2048))
    assert out_tiled.shape == U.shape
    assert jnp.allclose(out_tiled, ref, atol=1e-5, rtol=1e-5), "tiled mismatch"

    print("KERNEL_OK")
</pallas_src>

<mosaic_0001>
module attributes {stable_mosaic.version = 11 : i64} {
  func.func @_fused_cse_kernel(%arg0: i32, %arg1: memref<2x4x256xf32, #tpu.memory_space<vmem>>, %arg2: memref<4x2xf32, #tpu.memory_space<vmem>>, %arg3: memref<2x4xf32, #tpu.memory_space<vmem>>, %arg4: memref<2x4x256xf32, #tpu.memory_space<vmem>>) attributes {dimension_semantics = [#tpu.dimension_semantics<parallel>], iteration_bounds = array<i64: 1>, scalar_prefetch = 0 : i64, scratch_operands = 0 : i64, tpu.core_type = #tpu.core_type<tc>, window_params = [{transform_indices = @transform_0, window_bounds = array<i64: 2, 4, 256>}, {pipeline_mode = #tpu.pipeline_mode<synchronous>, transform_indices = @transform_1, window_bounds = array<i64: 4, 2>}, {pipeline_mode = #tpu.pipeline_mode<synchronous>, transform_indices = @transform_2, window_bounds = array<i64: 2, 4>}, {transform_indices = @transform_3, window_bounds = array<i64: 2, 4, 256>}]} {
    %c0 = arith.constant 0 : index
    %c0_0 = arith.constant 0 : index
    %c0_1 = arith.constant 0 : index
    %0 = vector.load %arg1[%c0, %c0_0, %c0_1] : memref<2x4x256xf32, #tpu.memory_space<vmem>>, vector<2x4x256xf32>
    %cst = arith.constant dense<0.000000e+00> : vector<2x4xf32>
    %1 = vector.multi_reduction <add>, %0, %cst [2] : vector<2x4x256xf32> to vector<2x4xf32>
    %cst_2 = arith.constant 3.906250e-03 : f32
    %2 = vector.broadcast %cst_2 : f32 to vector<2x4xf32>
    %3 = arith.mulf %1, %2 : vector<2x4xf32>
    %c0_3 = arith.constant 0 : index
    %c0_4 = arith.constant 0 : index
    %4 = vector.load %arg2[%c0_3, %c0_4] : memref<4x2xf32, #tpu.memory_space<vmem>>, vector<4x2xf32>
    %c0_5 = arith.constant 0 : index
    %c0_6 = arith.constant 0 : index
    %5 = vector.load %arg3[%c0_5, %c0_6] : memref<2x4xf32, #tpu.memory_space<vmem>>, vector<2x4xf32>
    %6 = vector.shape_cast %3 : vector<2x4xf32> to vector<2x4x1xf32>
    %7 = vector.shape_cast %4 : vector<4x2xf32> to vector<1x4x2xf32>
    %8 = vector.broadcast %6 : vector<2x4x1xf32> to vector<2x4x2xf32>
    %9 = vector.broadcast %7 : vector<1x4x2xf32> to vector<2x4x2xf32>
    %10 = arith.mulf %8, %9 : vector<2x4x2xf32>
    %cst_7 = arith.constant dense<0.000000e+00> : vector<2x2xf32>
    %11 = vector.multi_reduction <add>, %10, %cst_7 [1] : vector<2x4x2xf32> to vector<2x2xf32>
    %12 = vector.shape_cast %11 : vector<2x2xf32> to vector<2x2x1xf32>
    %13 = vector.shape_cast %5 : vector<2x4xf32> to vector<1x2x4xf32>
    %14 = vector.broadcast %12 : vector<2x2x1xf32> to vector<2x2x4xf32>
    %15 = vector.broadcast %13 : vector<1x2x4xf32> to vector<2x2x4xf32>
    %16 = arith.mulf %14, %15 : vector<2x2x4xf32>
    %cst_8 = arith.constant dense<0.000000e+00> : vector<2x4xf32>
    %17 = vector.multi_reduction <add>, %16, %cst_8 [1] : vector<2x2x4xf32> to vector<2x4xf32>
    %18 = arith.negf %17 : vector<2x4xf32>
    %19 = math.exp %18 : vector<2x4xf32>
    %cst_9 = arith.constant 1.000000e+00 : f32
    %20 = vector.broadcast %cst_9 : f32 to vector<2x4xf32>
    %21 = arith.addf %20, %19 : vector<2x4xf32>
    %22 = arith.divf %20, %21 : vector<2x4xf32>
    %23 = vector.shape_cast %22 : vector<2x4xf32> to vector<2x4x1xf32>
    %24 = vector.broadcast %23 : vector<2x4x1xf32> to vector<2x4x256xf32>
    %25 = arith.mulf %0, %24 : vector<2x4x256xf32>
    %c0_10 = arith.constant 0 : index
    %c0_11 = arith.constant 0 : index
    %c0_12 = arith.constant 0 : index
    %26 = vector.load %arg4[%c0_10, %c0_11, %c0_12] : memref<2x4x256xf32, #tpu.memory_space<vmem>>, vector<2x4x256xf32>
    tpu.vector_store %arg4[%c0_10, %c0_11, %c0_12], %25 {strides = array<i32>} : memref<2x4x256xf32, #tpu.memory_space<vmem>>, vector<2x4x256xf32>,
    return
  }
  func.func @transform_0(%arg0: i32) -> (i32, i32, i32) {
    %c0_i32 = arith.constant 0 : i32
    %c0_i32_0 = arith.constant 0 : i32
    %c0_i32_1 = arith.constant 0 : i32
    return %arg0, %c0_i32, %c0_i32_0 : i32, i32, i32
  }
  func.func @transform_1(%arg0: i32) -> (i32, i32) {
    %c0_i32 = arith.constant 0 : i32
    %c0_i32_0 = arith.constant 0 : i32
    %c0_i32_1 = arith.constant 0 : i32
    return %c0_i32, %c0_i32_0 : i32, i32
  }
  func.func @transform_2(%arg0: i32) -> (i32, i32) {
    %c0_i32 = arith.constant 0 : i32
    %c0_i32_0 = arith.constant 0 : i32
    %c0_i32_1 = arith.constant 0 : i32
    return %c0_i32, %c0_i32_0 : i32, i32
  }
  func.func @transform_3(%arg0: i32) -> (i32, i32, i32) {
    %c0_i32 = arith.constant 0 : i32
    %c0_i32_0 = arith.constant 0 : i32
    %c0_i32_1 = arith.constant 0 : i32
    return %arg0, %c0_i32, %c0_i32_0 : i32, i32, i32
  }
}

</mosaic_0001>

<llo_original>
// kernel: tpu_custom_call.1
$region0: #{tpu_custom_call.1}
  #allocation0 [shape = 'u32[]', space=smem, size = 0x4, offset = 0x4, fixed_abs, tag = 'smem constant byte address 0x4 - core index']
  #allocation1 [shape = 'u32[144,128]{1,0:T(1,128)}', space=vmem, size = 0x12000, scoped, tag = 'internal scratch']
  %s0 = inlined_call_operand.hbm [shape: f32[2,4,256], index: 0, kind: input, shape index: {}]
  %s1 = inlined_call_operand.vmem [shape: f32[4,2], index: 1, kind: input, shape index: {}]
  %s2 = inlined_call_operand.vmem [shape: f32[2,4], index: 2, kind: input, shape index: {}]
  %s3 = inlined_call_operand.hbm [shape: f32[2,4,256], index: 3, kind: output, shape index: {}]
  %s4 = sld [smem:[#allocation0]]
  $region26: #{tpu_custom_call.1} parent=0
    _
  %s6 = ssub.s32 1, %s4
  %s7 = scalar_select 0, %s6, %s4
  $region1: #{tpu_custom_call.1} parent=0
    #allocation2 [shape = 'u8[8192]{0}', space=vmem, size = 0x2000, scoped, tag = 'input window, operand 0, single buffered']
    #allocation3 [shape = 's32[1]{0}', space=sflag, size = 0x4, scoped, tag = 'scoped memory for tpu_custom_call.1']
    #allocation4 [shape = 's32[1]{0}', space=sflag, size = 0x4, scoped, tag = 'scoped memory for tpu_custom_call.1']
    #allocation5 [shape = 'u8[8192]{0}', space=vmem, size = 0x2000, scoped, tag = 'output window, operand 0, single buffered']
    %8 = vsyncpa [#allocation3], 0
    %9 = vsyncpa [#allocation4], 0
    // Predicated region
    $region2: #{tpu_custom_call.1} parent=1 // pred_check
      _
    $region3: #{tpu_custom_call.1} parent=1 // pred_check_branch
      %11 = sbr.rel (0) target = $region5
    $region4: #{tpu_custom_call.1} parent=1 // pred_region
      %s13 = ssub.s32 256, 256
      %14 = vsyncadd [#allocation3], %s13
      %s15 = sshll.u32 [#allocation2], 4
      %s16 = int_to_ptr.vmem [resolvable:$true] %s15
      %21 = dma.hbm_to_vmem [thread:$0]  %s0, 256, %s16, [#allocation3], 128, 128, 8
    $region5: #{tpu_custom_call.1} parent=1 // pred_fallthru
      _
    // Predicated region
    $region6: #{tpu_custom_call.1} parent=1 // pred_check
      _
    $region7: #{tpu_custom_call.1} parent=1 // pred_check_branch
      %23 = sbr.rel (0) target = $region9
    $region8: #{tpu_custom_call.1} parent=1 // pred_region
      _
    $region9: #{tpu_custom_call.1} parent=1 // pred_fallthru
      _
    // Predicated region
    $region10: #{tpu_custom_call.1} parent=1 // pred_check
      _
    $region11: #{tpu_custom_call.1} parent=1 // pred_check_branch
      %25 = sbr.rel (0) target = $region13
    $region12: #{tpu_custom_call.1} parent=1 // pred_region
      _
    $region13: #{tpu_custom_call.1} parent=1 // pred_fallthru
      _
    // Predicated region
    $region14: #{tpu_custom_call.1} parent=1 // pred_check
      _
    $region15: #{tpu_custom_call.1} parent=1 // pred_check_branch
      %27 = sbr.rel (0) target = $region17
    $region16: #{tpu_custom_call.1} parent=1 // pred_region
      %28 = dma.done [#allocation3], 256
    $region17: #{tpu_custom_call.1} parent=1 // pred_fallthru
      _
    %v29 = vld [vmem:[#allocation2] sm:$0xff]
    %v30 = vld [vmem:[#allocation2 + $0x8] sm:$0xff]
    %v33 = vcombine.high %v29, %v29
    %v34 = vcombine.high %v30, %v30
    %vm37 = vcmask 1043456
    %v38 = vsel %vm37, %v29, 0.0
    %v39 = vsel %vm37, %v33, 0.0
    %v40 = vadd.f32 %v38, %v39
    %41 = vadd.xlane.f32.xlu0 %v40
    %v42 = vpop.xlane.xlu0 %41
    %v43 = vsel %vm37, %v30, 0.0
    %v44 = vsel %vm37, %v34, 0.0
    %v45 = vadd.f32 %v43, %v44
    %46 = vadd.xlane.f32.xlu0 %v45
    %v47 = vpop.xlane.xlu0 %46
    %v48 = vmul.f32 %v42, 0.00390625
    %v49 = vmul.f32 %v47, 0.00390625
    %v50 = vld [vmem:[%s1] sm:$0xf]
    %v51 = vld [vmem:[%s2] sm:$0x3]
    %v52 = vmul.f32 %v48, %v50
    %v53 = vmul.f32 %v49, %v50
    %vm54 = vcmask 11264
    %v55 = vsel %vm54, %v52, 0.0
    %v56 = vrot.slane %v55, 4
    %v57 = vadd.f32 %v55, %v56
    %v58 = vrot.slane %v57, 2
    %v59 = vadd.f32 %v57, %v58
    %v60 = vrot.slane %v59, 1
    %v61 = vadd.f32 %v59, %v60
    %v62 = vsel %vm54, %v53, 0.0
    %v63 = vrot.slane %v62, 4
    %v64 = vadd.f32 %v62, %v63
    %v65 = vrot.slane %v64, 2
    %v66 = vadd.f32 %v64, %v65
    %v67 = vrot.slane %v66, 1
    %v68 = vadd.f32 %v66, %v67
    %70 = vbcast.lane.b32.xlu0 %v61, 256
    %v71 = vpop.permute.xlu0 %70
    %73 = vbcast.lane.b32.xlu0 %v68, 256
    %v74 = vpop.permute.xlu0 %73
    %v75 = vmul.f32 %v71, %v51
    %v76 = vmul.f32 %v74, %v51
    %vm77 = vcmask 25600
    %v78 = vsel %vm77, %v75, 0.0
    %v79 = vrot.slane %v78, 4
    %v80 = vadd.f32 %v78, %v79
    %v81 = vrot.slane %v80, 2
    %v82 = vadd.f32 %v80, %v81
    %v83 = vrot.slane %v82, 1
    %v84 = vadd.f32 %v82, %v83
    %v85 = vsel %vm77, %v76, 0.0
    %v86 = vrot.slane %v85, 4
    %v87 = vadd.f32 %v85, %v86
    %v88 = vrot.slane %v87, 2
    %v89 = vadd.f32 %v87, %v88
    %v90 = vrot.slane %v89, 1
    %v91 = vadd.f32 %v89, %v90
    %v92 = vxor.u32 %v84, 2147483648
    %v93 = vxor.u32 %v91, 2147483648
    %v94 = vmul.f32 %v92, 1.442695
    %v95 = vpow.pop %v94
    %v96 = vmul.f32 %v93, 1.442695
    %v97 = vpow.pop %v96
    %v98 = vadd.f32 %v95, 1.0
    %v99 = vadd.f32 %v97, 1.0
    %v100 = vrcp.pop %v98
    %v101 = vmul.f32 1.0, %v100
    %v102 = vrcp.pop %v99
    %v103 = vmul.f32 1.0, %v102
    %105 = vbcast.lane.b32.xlu0 %v101, 256
    %v106 = vpop.permute.xlu0 %105
    %108 = vbcast.lane.b32.xlu0 %v103, 256
    %v109 = vpop.permute.xlu0 %108
    %v113 = vunpack.c.l.s4 839922192
    %v114 = vunpack.c.0.s8 %v113
    %v115 = vlaneseq
    %v116 = vshrl.u32 %v115, 7
    %v117 = vsub.s32 %v114, %v116
    %v118 = vrot.slane %v106, %v117
    %v120 = vunpack.c.l.s4 839922192
    %v121 = vunpack.c.0.s8 %v120
    %v122 = vlaneseq
    %v123 = vshrl.u32 %v122, 7
    %v124 = vsub.s32 %v121, %v123
    %v125 = vrot.slane %v109, %v124
    %v128 = vmul.f32 %v29, %v118
    %v129 = vmul.f32 %v30, %v125
    %130 = vst [vmem:[#allocation5] sm:$0xff] %v128
    %131 = vst [vmem:[#allocation5 + $0x8] sm:$0xff] %v129
    // Predicated region
    $region18: #{tpu_custom_call.1} parent=1 // pred_check
      _
    $region19: #{tpu_custom_call.1} parent=1 // pred_check_branch
      %133 = sbr.rel (0) target = $region21
    $region20: #{tpu_custom_call.1} parent=1 // pred_region
      %s135 = ssub.s32 256, 256
      %136 = vsyncadd [#allocation4], %s135
      %s137 = sshll.u32 [#allocation5], 4
      %s138 = int_to_ptr.vmem [resolvable:$true] %s137
      %143 = dma.vmem_to_hbm [thread:$0]  %s138, 256, %s3, [#allocation4], 128, 128, 8
    $region21: #{tpu_custom_call.1} parent=1 // pred_fallthru
      _
    // Predicated region
    $region22: #{tpu_custom_call.1} parent=1 // pred_check
      _
    $region23: #{tpu_custom_call.1} parent=1 // pred_check_branch
      %145 = sbr.rel (0) target = $region25
    $region24: #{tpu_custom_call.1} parent=1 // pred_region
      %146 = dma.done [#allocation4], 256
    $region25: #{tpu_custom_call.1} parent=1 // pred_fallthru
      _
    %147 = vsyncpa [#allocation3], 1
    %148 = vsyncpa [#allocation4], 1

</llo_original>
